<compile_context>
chip_gen: v7x
topology: tpu7x:2x2x1
jax: 0.10.0
libtpu: 0.0.40
codegen_flags: <defaults>
</compile_context>

<pallas_src>
import functools

import numpy as np
import jax
import jax.numpy as jnp
from jax.experimental import pallas as pl
from jax.experimental.pallas import tpu as pltpu

A_PAD = 128  # lane-dense padded action dimension


# ----------------------------------------------------------------------------
# Pallas kernel: fused linear + bias + argmax(dim=1), gridded over batch tiles
# ----------------------------------------------------------------------------
def policy_act_kernel(feat_ref, w_ref, b_ref, scores_ref, idx_ref):
    feats = feat_ref[...]                                   # [TB, F]
    w = w_ref[...]                                          # [F, A_PAD] (VMEM-resident)
    scores = jnp.dot(feats, w, preferred_element_type=jnp.float32)
    scores = scores + b_ref[...]                            # padded lanes carry -1e30 bias
    scores_ref[...] = scores                                # lane-dense f32 store

    # argmax over dim=1, first-max-wins (matches torch.argmax tie behaviour).
    # Two XLU reductions — free filler next to the single vmatmul.
    TB, AP = scores.shape
    col = jax.lax.broadcasted_iota(jnp.int32, (TB, AP), 1)
    row_max = jnp.max(scores, axis=1, keepdims=True)
    masked = jnp.where(scores == row_max, col, jnp.int32(AP))
    idx = jnp.min(masked, axis=1, keepdims=True)            # [TB, 1]
    # Widen to a lane-dense int32 store (avoid 1-lane vst.msk); sliced outside.
    idx_ref[...] = jnp.broadcast_to(idx, (TB, AP)).astype(jnp.int32)


def policy_act_pallas(feats_padded, w_t_pad, b_pad, *, tb):
    """feats_padded: [Bp, F] (Bp % tb == 0), w_t_pad: [F, A_PAD], b_pad: [1, A_PAD]."""
    Bp, F = feats_padded.shape
    grid = (Bp // tb,)
    scores, idx = pl.pallas_call(
        policy_act_kernel,
        out_shape=(
            jax.ShapeDtypeStruct((Bp, A_PAD), jnp.float32),
            jax.ShapeDtypeStruct((Bp, A_PAD), jnp.int32),
        ),
        grid=grid,
        in_specs=[
            pl.BlockSpec((tb, F), lambda i: (i, 0)),
            pl.BlockSpec((F, A_PAD), lambda i: (0, 0)),      # weight pinned in VMEM
            pl.BlockSpec((1, A_PAD), lambda i: (0, 0)),      # bias pinned in VMEM
        ],
        out_specs=(
            pl.BlockSpec((tb, A_PAD), lambda i: (i, 0)),
            pl.BlockSpec((tb, A_PAD), lambda i: (i, 0)),
        ),
        compiler_params=pltpu.CompilerParams(
            dimension_semantics=("parallel",)),              # v7x: shard B over 2 TCs
    )(feats_padded, w_t_pad, b_pad)
    return scores, idx


# ----------------------------------------------------------------------------
# Parameter init (deterministic, mirrors CategoricalNet.__init__); the weight
# transpose, A->128 lane padding and bias reshape happen HERE, once.
# ----------------------------------------------------------------------------
def orthogonal_init(key, shape, gain):
    """Equivalent of nn.init.orthogonal_(weight, gain) for a 2-D weight."""
    rows, cols = shape
    a = jax.random.normal(key, (max(rows, cols), min(rows, cols)), jnp.float32)
    q, r = jnp.linalg.qr(a)
    q = q * jnp.sign(jnp.diag(r))                           # deterministic sign
    if rows < cols:
        q = q.T
    return (gain * q[:rows, :cols]).astype(jnp.float32)


def init_policy_params(key, num_inputs, dim_actions, compute_dtype=jnp.float32):
    w = orthogonal_init(key, (dim_actions, num_inputs), gain=0.01)   # torch layout [A, F]
    b = jnp.zeros((dim_actions,), jnp.float32)                       # constant_(bias, 0)
    # Hoisted to init: transpose to [F, A] and pad A -> 128 lanes (zeros).
    w_t_pad = jnp.zeros((num_inputs, A_PAD), compute_dtype)
    w_t_pad = w_t_pad.at[:, :dim_actions].set(w.T.astype(compute_dtype))
    # Padded bias lanes get a huge negative so argmax never picks a padded action.
    b_pad = jnp.full((1, A_PAD), -1e30, jnp.float32)
    b_pad = b_pad.at[0, :dim_actions].set(b)
    return {"w_raw": w, "b_raw": b, "w_t_pad": w_t_pad, "b_pad": b_pad}


# ----------------------------------------------------------------------------
# Policy.act wrapper — fully on-device (jit), epsilon-greedy via jax.random
# ----------------------------------------------------------------------------
@functools.partial(jax.jit, static_argnames=("dim_actions", "tb"))
def policy_act(w_t_pad, b_pad, features, rng_key, epsilon, *, dim_actions, tb=128):
    B, F = features.shape
    Bp = pl.cdiv(B, tb) * tb
    feats = features.astype(w_t_pad.dtype)                  # bf16 path if params are bf16
    if Bp != B:
        feats = jnp.pad(feats, ((0, Bp - B), (0, 0)))

    scores_pad, idx_pad = policy_act_pallas(feats, w_t_pad, b_pad, tb=tb)
    action_scores = scores_pad[:B, :dim_actions]
    greedy = idx_pad[:B, :1]

    # Epsilon-greedy override, on-device (no host sync / transfer per step).
    k_eps, k_act = jax.random.split(rng_key)
    explore = jax.random.uniform(k_eps, ()) < epsilon
    rand_a = jax.random.randint(k_act, (), 0, dim_actions).astype(jnp.int32)
    # TODO(synk): the torch original reshapes one scalar action to a (1,1) tensor
    # regardless of batch size; we keep a static (B, 1) shape and broadcast instead.
    action = jnp.where(explore, jnp.full_like(greedy, rand_a), greedy)
    return action, action_scores


if __name__ == "__main__":
    # batch gridded into 2 tiles of 128; F = net.output_size; A = dim_actions
    B, F, A = 256, 32, 3
    key = jax.random.PRNGKey(0)
    k_feat, k_w, k_rng = jax.random.split(key, 3)

    params = init_policy_params(k_w, F, A)                  # compute_dtype=jnp.bfloat16 also works
    # TODO(synk): `self.net` is abstract in Policy; features are taken as kernel
    # input directly and rnn_hidden_states are passed through unchanged.
    features = jax.random.normal(k_feat, (B, F), jnp.float32)

    # epsilon = 0 -> purely greedy, deterministic; verify against plain-JAX reference.
    action, action_scores = policy_act(
        params["w_t_pad"], params["b_pad"], features, k_rng, 0.0, dim_actions=A)
    jax.block_until_ready((action, action_scores))

    ref_scores = features @ params["w_raw"].T + params["b_raw"]
    np.testing.assert_allclose(np.asarray(action_scores), np.asarray(ref_scores),
                               rtol=1e-5, atol=1e-5)
    # in-kernel argmax must be exactly consistent with the returned scores
    self_argmax = jnp.argmax(action_scores, axis=1).reshape(-1, 1).astype(jnp.int32)
    np.testing.assert_array_equal(np.asarray(action), np.asarray(self_argmax))

    # one call with the module's default epsilon=0.4 to exercise the on-device override
    action_eps, _ = policy_act(
        params["w_t_pad"], params["b_pad"], features, jax.random.PRNGKey(1), 0.4,
        dim_actions=A)
    jax.block_until_ready(action_eps)

    print("KERNEL_OK")
</pallas_src>

<mosaic_0001>
module attributes {stable_mosaic.version = 11 : i64} {
  func.func @policy_act_kernel(%arg0: i32, %arg1: memref<128x32xf32, #tpu.memory_space<vmem>>, %arg2: memref<32x128xf32, #tpu.memory_space<vmem>>, %arg3: memref<1x128xf32, #tpu.memory_space<vmem>>, %arg4: memref<128x128xf32, #tpu.memory_space<vmem>>, %arg5: memref<128x128xi32, #tpu.memory_space<vmem>>) attributes {dimension_semantics = [#tpu.dimension_semantics<parallel>], iteration_bounds = array<i64: 2>, scalar_prefetch = 0 : i64, scratch_operands = 0 : i64, tpu.core_type = #tpu.core_type<tc>, window_params = [{transform_indices = @transform_0, window_bounds = array<i64: 128, 32>}, {pipeline_mode = #tpu.pipeline_mode<synchronous>, transform_indices = @transform_1, window_bounds = array<i64: 32, 128>}, {pipeline_mode = #tpu.pipeline_mode<synchronous>, transform_indices = @transform_2, window_bounds = array<i64: 1, 128>}, {transform_indices = @transform_3, window_bounds = array<i64: 128, 128>}, {transform_indices = @transform_4, window_bounds = array<i64: 128, 128>}]} {
    %c0 = arith.constant 0 : index
    %c0_0 = arith.constant 0 : index
    %0 = vector.load %arg1[%c0, %c0_0] : memref<128x32xf32, #tpu.memory_space<vmem>>, vector<128x32xf32>
    %c0_1 = arith.constant 0 : index
    %c0_2 = arith.constant 0 : index
    %1 = vector.load %arg2[%c0_1, %c0_2] : memref<32x128xf32, #tpu.memory_space<vmem>>, vector<32x128xf32>
    %cst = arith.constant dense<0.000000e+00> : vector<128x128xf32>
    %2 = tpu.matmul %0, %1, %cst {dimension_numbers = #tpu.dot_dimension_numbers<[1], [0], [0], [1], [0, 0, 1, 1], [], []>} : vector<128x32xf32>, vector<32x128xf32>, vector<128x128xf32> -> vector<128x128xf32>
    %c0_3 = arith.constant 0 : index
    %c0_4 = arith.constant 0 : index
    %3 = vector.load %arg3[%c0_3, %c0_4] : memref<1x128xf32, #tpu.memory_space<vmem>>, vector<1x128xf32>
    %4 = vector.broadcast %3 : vector<1x128xf32> to vector<128x128xf32>
    %5 = arith.addf %2, %4 : vector<128x128xf32>
    %c0_5 = arith.constant 0 : index
    %c0_6 = arith.constant 0 : index
    %6 = vector.load %arg4[%c0_5, %c0_6] : memref<128x128xf32, #tpu.memory_space<vmem>>, vector<128x128xf32>
    tpu.vector_store %arg4[%c0_5, %c0_6], %5 {strides = array<i32>} : memref<128x128xf32, #tpu.memory_space<vmem>>, vector<128x128xf32>,
    %7 = tpu.iota {dimensions = array<i32: 1>} : vector<128x128xi32>
    %cst_7 = arith.constant dense<0xFF800000> : vector<128xf32>
    %8 = vector.multi_reduction <maximumf>, %5, %cst_7 [1] : vector<128x128xf32> to vector<128xf32>
    %9 = vector.shape_cast %8 : vector<128xf32> to vector<128x1xf32>
    %10 = vector.broadcast %9 : vector<128x1xf32> to vector<128x128xf32>
    %11 = arith.cmpf oeq, %5, %10 : vector<128x128xf32>
    %c128_i32 = arith.constant 128 : i32
    %12 = vector.broadcast %c128_i32 : i32 to vector<128x128xi32>
    %13 = arith.select %11, %7, %12 : vector<128x128xi1>, vector<128x128xi32>
    %cst_8 = arith.constant dense<2147483647> : vector<128xi32>
    %14 = vector.multi_reduction <minsi>, %13, %cst_8 [1] : vector<128x128xi32> to vector<128xi32>
    %15 = vector.shape_cast %14 : vector<128xi32> to vector<128x1xi32>
    %16 = vector.shape_cast %15 : vector<128x1xi32> to vector<128x1xi32>
    %17 = vector.broadcast %16 : vector<128x1xi32> to vector<128x128xi32>
    %c0_9 = arith.constant 0 : index
    %c0_10 = arith.constant 0 : index
    %18 = vector.load %arg5[%c0_9, %c0_10] : memref<128x128xi32, #tpu.memory_space<vmem>>, vector<128x128xi32>
    tpu.vector_store %arg5[%c0_9, %c0_10], %17 {strides = array<i32>} : memref<128x128xi32, #tpu.memory_space<vmem>>, vector<128x128xi32>,
    return
  }
  func.func @transform_0(%arg0: i32) -> (i32, i32) {
    %c0_i32 = arith.constant 0 : i32
    %c0_i32_0 = arith.constant 0 : i32
    return %arg0, %c0_i32 : i32, i32
  }
  func.func @transform_1(%arg0: i32) -> (i32, i32) {
    %c0_i32 = arith.constant 0 : i32
    %c0_i32_0 = arith.constant 0 : i32
    %c0_i32_1 = arith.constant 0 : i32
    return %c0_i32, %c0_i32_0 : i32, i32
  }
  func.func @transform_2(%arg0: i32) -> (i32, i32) {
    %c0_i32 = arith.constant 0 : i32
    %c0_i32_0 = arith.constant 0 : i32
    %c0_i32_1 = arith.constant 0 : i32
    return %c0_i32, %c0_i32_0 : i32, i32
  }
  func.func @transform_3(%arg0: i32) -> (i32, i32) {
    %c0_i32 = arith.constant 0 : i32
    %c0_i32_0 = arith.constant 0 : i32
    return %arg0, %c0_i32 : i32, i32
  }
  func.func @transform_4(%arg0: i32) -> (i32, i32) {
    %c0_i32 = arith.constant 0 : i32
    %c0_i32_0 = arith.constant 0 : i32
    return %arg0, %c0_i32 : i32, i32
  }
}

</mosaic_0001>

<llo_original>
// kernel: policy_act.1
$region0: #{policy_act.1}
  #allocation0 [shape = 'u32[]', space=smem, size = 0x4, offset = 0x4, fixed_abs, tag = 'smem constant byte address 0x4 - core index']
  #allocation1 [shape = 'u32[144,128]{1,0:T(1,128)}', space=vmem, size = 0x12000, scoped, tag = 'internal scratch']
  %s0 = inlined_call_operand.vmem [shape: f32[256,32], index: 0, kind: input, shape index: {}]
  %s1 = inlined_call_operand.vmem [shape: f32[32,128], index: 1, kind: input, shape index: {}]
  %s2 = inlined_call_operand.vmem [shape: f32[1,128], index: 2, kind: input, shape index: {}]
  %s3 = inlined_call_operand.vmem [shape: f32[256,128], index: 3, kind: output, shape index: {0}]
  %s4 = inlined_call_operand.vmem [shape: s32[256,128], index: 4, kind: output, shape index: {1}]
  %5 = xla_tuple %s3, %s4
  %s6 = sld [smem:[#allocation0]]
  $region53: #{policy_act.1} parent=0
    _
  %s8 = ssub.s32 1, %s6
  %s9 = scalar_select 0, %s8, %s6
  loop: start=0, step=1, limit=4
  $region2: #{policy_act.1} parent=0 // loop_pre_header
    _
  $region3: #{policy_act.1} parent=0 // loop_header
    %s11 = sphi 0, %s15
    %p12 = scmp.ge.s32.totalorder %s11, 4
    %s21 = sphi 0, %s23
    %s24 = sphi 0, %s21
    %s25 = sphi 0, %s24
    %s41 = sphi 0, %s25
    %s45 = sphi 0, %s45
    %s47 = sphi 0, %s45
    %s48 = sphi 0, %s47
    %s62 = sphi 0, %s48
    %s66 = sphi 0, %s66
    %s68 = sphi 0, %s66
    %s69 = sphi 0, %s68
    %s83 = sphi 0, %s69
    %s89 = sphi 0, %s91
    %s92 = sphi 0, %s89
    %s93 = sphi 0, %s92
    %s109 = sphi 0, %s93
    %s115 = sphi 0, %s117
    %s118 = sphi 0, %s115
    %s119 = sphi 0, %s118
    %s135 = sphi 0, %s119
  $region4: #{policy_act.1} parent=0 // loop_header_branch
    %14 = sbr.rel (%p12) target = $region8
  $region5: #{policy_act.1} parent=0 // loop_body
    %s16 = ssub.s32 %s11, 1
    %s17 = ssub.s32 %s11, 2
    %s18 = sadd.s32 %s11, 1
    %s19 = ssub.s32 %s11, %s18
    %p20 = scmp.eq.s32.totalorder %s19, 0
    %s22 = sadd.s32 %s21, 1
    %s23 = scalar_select %p20, %s21, %s22
    %p26 = pneg %p20
    %p27 = scmp.eq.s32.totalorder %s11, 1
    %p28 = por %p26, %p27
    %p29 = scmp.ne.s32.totalorder %s21, %s24
    %p30 = scmp.eq.s32.totalorder %s11, 0
    %p31 = por %p29, %p30
    %p32 = scmp.ne.s32.totalorder %s21, %s24
    %p33 = scmp.eq.s32.totalorder %s16, 1
    %p34 = por %p32, %p33
    %p35 = scmp.ne.s32.totalorder %s24, %s25
    %p36 = scmp.eq.s32.totalorder %s16, 0
    %p37 = por %p35, %p36
    %p38 = scmp.ne.s32.totalorder %s24, %s25
    %p39 = scmp.eq.s32.totalorder %s17, 1
    %p40 = por %p38, %p39
    %p42 = scmp.ne.s32.totalorder %s25, %s41
    %p43 = scmp.eq.s32.totalorder %s17, 0
    %p44 = por %p42, %p43
    %s46 = sadd.s32 %s45, 1
    %p49 = scmp.eq.s32.totalorder %s11, 1
    %p50 = scmp.ne.s32.totalorder %s45, %s47
    %p51 = scmp.eq.s32.totalorder %s11, 0
    %p52 = por %p50, %p51
    %p53 = scmp.ne.s32.totalorder %s45, %s47
    %p54 = scmp.eq.s32.totalorder %s16, 1
    %p55 = por %p53, %p54
    %p56 = scmp.ne.s32.totalorder %s47, %s48
    %p57 = scmp.eq.s32.totalorder %s16, 0
    %p58 = por %p56, %p57
    %p59 = scmp.ne.s32.totalorder %s47, %s48
    %p60 = scmp.eq.s32.totalorder %s17, 1
    %p61 = por %p59, %p60
    %p63 = scmp.ne.s32.totalorder %s48, %s62
    %p64 = scmp.eq.s32.totalorder %s17, 0
    %p65 = por %p63, %p64
    %s67 = sadd.s32 %s66, 1
    %p70 = scmp.eq.s32.totalorder %s11, 1
    %p71 = scmp.ne.s32.totalorder %s66, %s68
    %p72 = scmp.eq.s32.totalorder %s11, 0
    %p73 = por %p71, %p72
    %p74 = scmp.ne.s32.totalorder %s66, %s68
    %p75 = scmp.eq.s32.totalorder %s16, 1
    %p76 = por %p74, %p75
    %p77 = scmp.ne.s32.totalorder %s68, %s69
    %p78 = scmp.eq.s32.totalorder %s16, 0
    %p79 = por %p77, %p78
    %p80 = scmp.ne.s32.totalorder %s68, %s69
    %p81 = scmp.eq.s32.totalorder %s17, 1
    %p82 = por %p80, %p81
    %p84 = scmp.ne.s32.totalorder %s69, %s83
    %p85 = scmp.eq.s32.totalorder %s17, 0
    %p86 = por %p84, %p85
    %s87 = ssub.s32 %s11, %s18
    %p88 = scmp.eq.s32.totalorder %s87, 0
    %s90 = sadd.s32 %s89, 1
    %s91 = scalar_select %p88, %s89, %s90
    %p94 = pneg %p88
    %p95 = scmp.eq.s32.totalorder %s11, 1
    %p96 = por %p94, %p95
    %p97 = scmp.ne.s32.totalorder %s89, %s92
    %p98 = scmp.eq.s32.totalorder %s11, 0
    %p99 = por %p97, %p98
    %p100 = scmp.ne.s32.totalorder %s89, %s92
    %p101 = scmp.eq.s32.totalorder %s16, 1
    %p102 = por %p100, %p101
    %p103 = scmp.ne.s32.totalorder %s92, %s93
    %p104 = scmp.eq.s32.totalorder %s16, 0
    %p105 = por %p103, %p104
    %p106 = scmp.ne.s32.totalorder %s92, %s93
    %p107 = scmp.eq.s32.totalorder %s17, 1
    %p108 = por %p106, %p107
    %p110 = scmp.ne.s32.totalorder %s93, %s109
    %p111 = scmp.eq.s32.totalorder %s17, 0
    %p112 = por %p110, %p111
    %s113 = ssub.s32 %s11, %s18
    %p114 = scmp.eq.s32.totalorder %s113, 0
    %s116 = sadd.s32 %s115, 1
    %s117 = scalar_select %p114, %s115, %s116
    %p120 = pneg %p114
    %p121 = scmp.eq.s32.totalorder %s11, 1
    %p122 = por %p120, %p121
    %p123 = scmp.ne.s32.totalorder %s115, %s118
    %p124 = scmp.eq.s32.totalorder %s11, 0
    %p125 = por %p123, %p124
    %p126 = scmp.ne.s32.totalorder %s115, %s118
    %p127 = scmp.eq.s32.totalorder %s16, 1
    %p128 = por %p126, %p127
    %p129 = scmp.ne.s32.totalorder %s118, %s119
    %p130 = scmp.eq.s32.totalorder %s16, 0
    %p131 = por %p129, %p130
    %p132 = scmp.ne.s32.totalorder %s118, %s119
    %p133 = scmp.eq.s32.totalorder %s17, 1
    %p134 = por %p132, %p133
    %p136 = scmp.ne.s32.totalorder %s119, %s135
    %p137 = scmp.eq.s32.totalorder %s17, 0
    %p138 = por %p136, %p137
    %p139 = scmp.le.s32.totalorder 1, %s11
    %p140 = scmp.lt.s32.totalorder %s11, 3
    %p141 = pnand %p139, %p140
    %p142 = pneg %p141
    // Predicated region
    $region9: #{policy_act.1} parent=5 // pred_check
      _
    $region10: #{policy_act.1} parent=5 // pred_check_branch
      %144 = sbr.rel (%p141) target = $region12
    $region11: #{policy_act.1} parent=5 // pred_region
      %s145 = ssub.s32 %s11, 1
      // Predicated region
      $region13: #{policy_act.1} parent=11 // pred_check
        %p146 = pneg %p58
      $region14: #{policy_act.1} parent=11 // pred_check_branch
        %148 = sbr.rel (%p146) target = $region16
      $region15: #{policy_act.1} parent=11 // pred_region
        _
      $region16: #{policy_act.1} parent=11 // pred_fallthru
        _
      // Predicated region
      $region17: #{policy_act.1} parent=11 // pred_check
        %p149 = pneg %p79
      $region18: #{policy_act.1} parent=11 // pred_check_branch
        %151 = sbr.rel (%p149) target = $region20
      $region19: #{policy_act.1} parent=11 // pred_region
        _
      $region20: #{policy_act.1} parent=11 // pred_fallthru
        _
    $region12: #{policy_act.1} parent=5 // pred_fallthru
      _
    %p152 = scmp.lt.s32.totalorder %s11, 2
    // Predicated region
    $region21: #{policy_act.1} parent=5 // pred_check
      %p153 = pneg %p152
    $region22: #{policy_act.1} parent=5 // pred_check_branch
      %155 = sbr.rel (%p153) target = $region24
    $region23: #{policy_act.1} parent=5 // pred_region
      // Predicated region
      $region25: #{policy_act.1} parent=23 // pred_check
        %p156 = pneg %p31
      $region26: #{policy_act.1} parent=23 // pred_check_branch
        %158 = sbr.rel (%p156) target = $region28
      $region27: #{policy_act.1} parent=23 // pred_region
        %s159 = smul.u32 16, %s11
        %p160 = scmp.lt.s32.totalorder %s159, 31
        %s161 = scalar_select %p160, %s159, 31
        %s162 = smul.addr %s161, 8
        %s163 = scalar_lea.vmem %s0, %s162
        %s164 = smul.u32 16, %s11
      $region28: #{policy_act.1} parent=23 // pred_fallthru
        _
    $region24: #{policy_act.1} parent=5 // pred_fallthru
      _
    %p165 = scmp.le.s32.totalorder 1, %s11
    %p166 = scmp.lt.s32.totalorder %s11, 3
    %p167 = pnand %p165, %p166
    %p168 = pneg %p167
    // Predicated region
    $region29: #{policy_act.1} parent=5 // pred_check
      _
    $region30: #{policy_act.1} parent=5 // pred_check_branch
      %170 = sbr.rel (%p167) target = $region32
    $region31: #{policy_act.1} parent=5 // pred_region
      %s171 = ssub.s32 %s11, 1
      %s172 = smul.u32 16, %s16
      %p173 = scmp.lt.s32.totalorder %s172, 31
      %s174 = scalar_select %p173, %s172, 31
      %s175 = smul.addr %s174, 8
      %s176 = scalar_lea.vmem %s0, %s175
      %p177 = pneg %p37
      %p178 = pneg %p34
      %p179 = pneg %p58
      %p180 = pneg %p55
      %p181 = pneg %p79
      %p182 = pneg %p76
      %p183 = pneg %p105
      %p184 = pneg %p102
      %s185 = smul.u32 16, %s16
      %p186 = scmp.lt.s32.totalorder %s185, 31
      %s187 = scalar_select %p186, %s185, 31
      %s188 = smul.addr %s187, 8
      %s189 = scalar_lea.vmem %s3, %s188
      %p190 = pneg %p131
      %p191 = pneg %p128
      %s192 = smul.u32 16, %s16
      %p193 = scmp.lt.s32.totalorder %s192, 31
      %s194 = scalar_select %p193, %s192, 31
      %s195 = smul.addr %s194, 8
      %s196 = scalar_lea.vmem %s4, %s195
      %s197 = smul.u32 16, %s16
      %p198 = scmp.lt.s32.totalorder %s197, 31
      %s199 = scalar_select %p198, %s197, 31
      %s200 = smul.addr %s199, 8
      %s201 = scalar_lea.vmem %s0, %s200
      %s202 = smul.u32 16, %s16
      %s203 = smul.u32 16, %s16
      %p204 = scmp.lt.s32.totalorder %s203, 31
      %s205 = scalar_select %p204, %s203, 31
      %s206 = smul.addr %s205, 8
      %s207 = scalar_lea.vmem %s3, %s206
      %s208 = smul.u32 16, %s16
      %s209 = smul.u32 16, %s16
      %p210 = scmp.lt.s32.totalorder %s209, 31
      %s211 = scalar_select %p210, %s209, 31
      %s212 = smul.addr %s211, 8
      %s213 = scalar_lea.vmem %s4, %s212
      %s214 = smul.u32 16, %s16
      %v215 = vld [vmem:[%s201] sm:$0xff]
      %v216 = vld [vmem:[%s201 + $0x8] sm:$0xff]
      %v217 = vld [vmem:[%s201 + $0x10] sm:$0xff]
      %v218 = vld [vmem:[%s201 + $0x18] sm:$0xff]
      %v219 = vld [vmem:[%s201 + $0x20] sm:$0xff]
      %v220 = vld [vmem:[%s201 + $0x28] sm:$0xff]
      %v221 = vld [vmem:[%s201 + $0x30] sm:$0xff]
      %v222 = vld [vmem:[%s201 + $0x38] sm:$0xff]
      %v223 = vld [vmem:[%s201 + $0x40] sm:$0xff]
      %v224 = vld [vmem:[%s201 + $0x48] sm:$0xff]
      %v225 = vld [vmem:[%s201 + $0x50] sm:$0xff]
      %v226 = vld [vmem:[%s201 + $0x58] sm:$0xff]
      %v227 = vld [vmem:[%s201 + $0x60] sm:$0xff]
      %v228 = vld [vmem:[%s201 + $0x68] sm:$0xff]
      %v229 = vld [vmem:[%s201 + $0x70] sm:$0xff]
      %v230 = vld [vmem:[%s201 + $0x78] sm:$0xff]
      %v231 = vld [vmem:[%s1] sm:$0xff]
      %v232 = vld [vmem:[%s1 + $0x8] sm:$0xff]
      %v233 = vld [vmem:[%s1 + $0x10] sm:$0xff]
      %v234 = vld [vmem:[%s1 + $0x18] sm:$0xff]
      %v235 = vld [vmem:[%s2] sm:$0x1]
      %v237 = vlaneseq
      %v238 = vshrl.u32 %v237, 7
      %v239 = vsub.s32 0, %v238
      %v240 = vrot.slane %v235, %v239
      %vm242 = vcmask 261120
      %v244 = vsel %vm242, %v215, 0
      %v247 = vsel %vm242, %v216, 0
      %v250 = vsel %vm242, %v217, 0
      %v253 = vsel %vm242, %v218, 0
      %v256 = vsel %vm242, %v219, 0
      %v259 = vsel %vm242, %v220, 0
      %v262 = vsel %vm242, %v221, 0
      %v265 = vsel %vm242, %v222, 0
      %v268 = vsel %vm242, %v223, 0
      %v271 = vsel %vm242, %v224, 0
      %v274 = vsel %vm242, %v225, 0
      %v277 = vsel %vm242, %v226, 0
      %v280 = vsel %vm242, %v227, 0
      %v283 = vsel %vm242, %v228, 0
      %v286 = vsel %vm242, %v229, 0
      %v289 = vsel %vm242, %v230, 0
      %291 = vmatprep.subr.mxu0 0.0
      %292 = vmatpush1.msra.mxu0 %v231
      %293 = vmatprep.subr.mxu0 0.0
      %294 = vmatpush1.msra.mxu0 %v232
      %295 = vmatprep.subr.mxu0 0.0
      %296 = vmatpush1.msra.mxu0 %v233
      %297 = vmatprep.subr.mxu0 0.0
      %298 = vmatpush1.msra.mxu0 %v234
      %299 = vmatprep.subr.mxu0 0.0
      %300 = vmatpush1.msra.mxu0 0.0
      %301 = vmatprep.subr.mxu0 0.0
      %302 = vmatpush1.msra.mxu0 0.0
      %303 = vmatprep.subr.mxu0 0.0
      %304 = vmatpush1.msra.mxu0 0.0
      %305 = vmatprep.subr.mxu0 0.0
      %306 = vmatpush1.msra.mxu0 0.0
      %307 = vmatprep.subr.mxu0 0.0
      %308 = vmatpush1.msra.mxu0 0.0
      %309 = vmatprep.subr.mxu0 0.0
      %310 = vmatpush1.msra.mxu0 0.0
      %311 = vmatprep.subr.mxu0 0.0
      %312 = vmatpush1.msra.mxu0 0.0
      %313 = vmatprep.subr.mxu0 0.0
      %314 = vmatpush1.msra.mxu0 0.0
      %315 = vmatprep.subr.mxu0 0.0
      %316 = vmatpush1.msra.mxu0 0.0
      %317 = vmatprep.subr.mxu0 0.0
      %318 = vmatpush1.msra.mxu0 0.0
      %319 = vmatprep.subr.mxu0 0.0
      %320 = vmatpush1.msra.mxu0 0.0
      %321 = vmatprep.subr.mxu0 0.0
      %322 = vmatpush1.msra.mxu0 0.0
      %323 = vmatprep.subr.mxu0 0.0
      %324 = vmatpush1.msra.mxu0 0.0
      %325 = vmatprep.subr.mxu0 0.0
      %326 = vmatpush1.msra.mxu0 0.0
      %327 = vmatprep.subr.mxu0 0.0
      %328 = vmatpush1.msra.mxu0 0.0
      %329 = vmatprep.subr.mxu0 0.0
      %330 = vmatpush1.msra.mxu0 0.0
      %331 = vmatprep.subr.mxu0 0.0
      %332 = vmatpush1.msra.mxu0 0.0
      %333 = vmatprep.subr.mxu0 0.0
      %334 = vmatpush1.msra.mxu0 0.0
      %335 = vmatprep.subr.mxu0 0.0
      %336 = vmatpush1.msra.mxu0 0.0
      %337 = vmatprep.subr.mxu0 0.0
      %338 = vmatpush1.msra.mxu0 0.0
      %339 = vmatprep.subr.mxu0 0.0
      %340 = vmatpush1.msra.mxu0 0.0
      %341 = vmatprep.subr.mxu0 0.0
      %342 = vmatpush1.msra.mxu0 0.0
      %343 = vmatprep.subr.mxu0 0.0
      %344 = vmatpush1.msra.mxu0 0.0
      %345 = vmatprep.subr.mxu0 0.0
      %346 = vmatpush1.msra.mxu0 0.0
      %347 = vmatprep.subr.mxu0 0.0
      %348 = vmatpush1.msra.mxu0 0.0
      %349 = vmatprep.subr.mxu0 0.0
      %350 = vmatpush1.msra.mxu0 0.0
      %351 = vmatprep.subr.mxu0 0.0
      %352 = vmatpush1.msra.mxu0 0.0
      %353 = vmatprep.subr.mxu0 0.0
      %354 = vmatpush1.msra.mxu0 0.0
      %355 = vmatprep.mubr.f32.mxu0 0.0
      %356 = vmatmul.mubr.f32.gmra.mrb[0].mxu0 %v244
      %v357 = vpop.f32.mrb[0].mxu0
      %v358 = vadd.f32 %v240, %v357
      %v359 = vpop.f32.mrb[0].mxu0
      %360 = vmatprep.mubr.f32.mxu0 0.0
      %361 = vmatmul.mubr.f32.gmra.mrb[0].mxu0 %v247
      %v362 = vpop.f32.mrb[0].mxu0
      %v363 = vadd.f32 %v240, %v362
      %v364 = vpop.f32.mrb[0].mxu0
      %365 = vmatprep.mubr.f32.mxu0 0.0
      %366 = vmatmul.mubr.f32.gmra.mrb[0].mxu0 %v250
      %v367 = vpop.f32.mrb[0].mxu0
      %v368 = vadd.f32 %v240, %v367
      %v369 = vpop.f32.mrb[0].mxu0
      %370 = vmatprep.mubr.f32.mxu0 0.0
      %371 = vmatmul.mubr.f32.gmra.mrb[0].mxu0 %v253
      %v372 = vpop.f32.mrb[0].mxu0
      %v373 = vadd.f32 %v240, %v372
      %v374 = vpop.f32.mrb[0].mxu0
      %375 = vmatprep.mubr.f32.mxu0 0.0
      %376 = vmatmul.mubr.f32.gmra.mrb[0].mxu0 %v256
      %v377 = vpop.f32.mrb[0].mxu0
      %v378 = vadd.f32 %v240, %v377
      %v379 = vpop.f32.mrb[0].mxu0
      %380 = vmatprep.mubr.f32.mxu0 0.0
      %381 = vmatmul.mubr.f32.gmra.mrb[0].mxu0 %v259
      %v382 = vpop.f32.mrb[0].mxu0
      %v383 = vadd.f32 %v240, %v382
      %v384 = vpop.f32.mrb[0].mxu0
      %385 = vmatprep.mubr.f32.mxu0 0.0
      %386 = vmatmul.mubr.f32.gmra.mrb[0].mxu0 %v262
      %v387 = vpop.f32.mrb[0].mxu0
      %v388 = vadd.f32 %v240, %v387
      %v389 = vpop.f32.mrb[0].mxu0
      %390 = vmatprep.mubr.f32.mxu0 0.0
      %391 = vmatmul.mubr.f32.gmra.mrb[0].mxu0 %v265
      %v392 = vpop.f32.mrb[0].mxu0
      %v393 = vadd.f32 %v240, %v392
      %v394 = vpop.f32.mrb[0].mxu0
      %395 = vmatprep.mubr.f32.mxu0 0.0
      %396 = vmatmul.mubr.f32.gmra.mrb[0].mxu0 %v268
      %v397 = vpop.f32.mrb[0].mxu0
      %v398 = vadd.f32 %v240, %v397
      %v399 = vpop.f32.mrb[0].mxu0
      %400 = vmatprep.mubr.f32.mxu0 0.0
      %401 = vmatmul.mubr.f32.gmra.mrb[0].mxu0 %v271
      %v402 = vpop.f32.mrb[0].mxu0
      %v403 = vadd.f32 %v240, %v402
      %v404 = vpop.f32.mrb[0].mxu0
      %405 = vmatprep.mubr.f32.mxu0 0.0
      %406 = vmatmul.mubr.f32.gmra.mrb[0].mxu0 %v274
      %v407 = vpop.f32.mrb[0].mxu0
      %v408 = vadd.f32 %v240, %v407
      %v409 = vpop.f32.mrb[0].mxu0
      %410 = vmatprep.mubr.f32.mxu0 0.0
      %411 = vmatmul.mubr.f32.gmra.mrb[0].mxu0 %v277
      %v412 = vpop.f32.mrb[0].mxu0
      %v413 = vadd.f32 %v240, %v412
      %v414 = vpop.f32.mrb[0].mxu0
      %415 = vmatprep.mubr.f32.mxu0 0.0
      %416 = vmatmul.mubr.f32.gmra.mrb[0].mxu0 %v280
      %v417 = vpop.f32.mrb[0].mxu0
      %v418 = vadd.f32 %v240, %v417
      %v419 = vpop.f32.mrb[0].mxu0
      %420 = vmatprep.mubr.f32.mxu0 0.0
      %421 = vmatmul.mubr.f32.gmra.mrb[0].mxu0 %v283
      %v422 = vpop.f32.mrb[0].mxu0
      %v423 = vadd.f32 %v240, %v422
      %v424 = vpop.f32.mrb[0].mxu0
      %425 = vmatprep.mubr.f32.mxu0 0.0
      %426 = vmatmul.mubr.f32.gmra.mrb[0].mxu0 %v286
      %v427 = vpop.f32.mrb[0].mxu0
      %v428 = vadd.f32 %v240, %v427
      %v429 = vpop.f32.mrb[0].mxu0
      %430 = vmatprep.mubr.f32.mxu0 0.0
      %431 = vmatmul.mubr.f32.gmra.mrb[0].mxu0 %v289
      %v432 = vpop.f32.mrb[0].mxu0
      %v433 = vadd.f32 %v240, %v432
      %v434 = vpop.f32.mrb[0].mxu0
      %435 = vdwg.mxu0
      %436 = vst [vmem:[%s207] sm:$0xff] %v358
      %437 = vst [vmem:[%s207 + $0x8] sm:$0xff] %v363
      %438 = vst [vmem:[%s207 + $0x10] sm:$0xff] %v368
      %439 = vst [vmem:[%s207 + $0x18] sm:$0xff] %v373
      %440 = vst [vmem:[%s207 + $0x20] sm:$0xff] %v378
      %441 = vst [vmem:[%s207 + $0x28] sm:$0xff] %v383
      %442 = vst [vmem:[%s207 + $0x30] sm:$0xff] %v388
      %443 = vst [vmem:[%s207 + $0x38] sm:$0xff] %v393
      %444 = vst [vmem:[%s207 + $0x40] sm:$0xff] %v398
      %445 = vst [vmem:[%s207 + $0x48] sm:$0xff] %v403
      %446 = vst [vmem:[%s207 + $0x50] sm:$0xff] %v408
      %447 = vst [vmem:[%s207 + $0x58] sm:$0xff] %v413
      %448 = vst [vmem:[%s207 + $0x60] sm:$0xff] %v418
      %449 = vst [vmem:[%s207 + $0x68] sm:$0xff] %v423
      %450 = vst [vmem:[%s207 + $0x70] sm:$0xff] %v428
      %451 = vst [vmem:[%s207 + $0x78] sm:$0xff] %v433
      %v452 = vlaneseq
      %v453 = vand.u32 %v452, 127
      %454 = vmax.xlane.f32.xlu0 %v358
      %v455 = vpop.xlane.xlu0 %454
      %456 = vmax.xlane.f32.xlu0 %v363
      %v457 = vpop.xlane.xlu0 %456
      %458 = vmax.xlane.f32.xlu0 %v368
      %v459 = vpop.xlane.xlu0 %458
      %460 = vmax.xlane.f32.xlu0 %v373
      %v461 = vpop.xlane.xlu0 %460
      %462 = vmax.xlane.f32.xlu0 %v378
      %v463 = vpop.xlane.xlu0 %462
      %464 = vmax.xlane.f32.xlu0 %v383
      %v465 = vpop.xlane.xlu0 %464
      %466 = vmax.xlane.f32.xlu0 %v388
      %v467 = vpop.xlane.xlu0 %466
      %468 = vmax.xlane.f32.xlu0 %v393
      %v469 = vpop.xlane.xlu0 %468
      %470 = vmax.xlane.f32.xlu0 %v398
      %v471 = vpop.xlane.xlu0 %470
      %472 = vmax.xlane.f32.xlu0 %v403
      %v473 = vpop.xlane.xlu0 %472
      %474 = vmax.xlane.f32.xlu0 %v408
      %v475 = vpop.xlane.xlu0 %474
      %476 = vmax.xlane.f32.xlu0 %v413
      %v477 = vpop.xlane.xlu0 %476
      %478 = vmax.xlane.f32.xlu0 %v418
      %v479 = vpop.xlane.xlu0 %478
      %480 = vmax.xlane.f32.xlu0 %v423
      %v481 = vpop.xlane.xlu0 %480
      %482 = vmax.xlane.f32.xlu0 %v428
      %v483 = vpop.xlane.xlu0 %482
      %484 = vmax.xlane.f32.xlu0 %v433
      %v485 = vpop.xlane.xlu0 %484
      %vm486 = vcmp.eq.f32.partialorder %v358, %v455
      %vm487 = vcmp.eq.f32.partialorder %v363, %v457
      %vm488 = vcmp.eq.f32.partialorder %v368, %v459
      %vm489 = vcmp.eq.f32.partialorder %v373, %v461
      %vm490 = vcmp.eq.f32.partialorder %v378, %v463
      %vm491 = vcmp.eq.f32.partialorder %v383, %v465
      %vm492 = vcmp.eq.f32.partialorder %v388, %v467
      %vm493 = vcmp.eq.f32.partialorder %v393, %v469
      %vm494 = vcmp.eq.f32.partialorder %v398, %v471
      %vm495 = vcmp.eq.f32.partialorder %v403, %v473
      %vm496 = vcmp.eq.f32.partialorder %v408, %v475
      %vm497 = vcmp.eq.f32.partialorder %v413, %v477
      %vm498 = vcmp.eq.f32.partialorder %v418, %v479
      %vm499 = vcmp.eq.f32.partialorder %v423, %v481
      %vm500 = vcmp.eq.f32.partialorder %v428, %v483
      %vm501 = vcmp.eq.f32.partialorder %v433, %v485
      %v502 = vsel %vm486, %v453, 128
      %v503 = vsel %vm487, %v453, 128
      %v504 = vsel %vm488, %v453, 128
      %v505 = vsel %vm489, %v453, 128
      %v506 = vsel %vm490, %v453, 128
      %v507 = vsel %vm491, %v453, 128
      %v508 = vsel %vm492, %v453, 128
      %v509 = vsel %vm493, %v453, 128
      %v510 = vsel %vm494, %v453, 128
      %v511 = vsel %vm495, %v453, 128
      %v512 = vsel %vm496, %v453, 128
      %v513 = vsel %vm497, %v453, 128
      %v514 = vsel %vm498, %v453, 128
      %v515 = vsel %vm499, %v453, 128
      %v516 = vsel %vm500, %v453, 128
      %v517 = vsel %vm501, %v453, 128
      %v518 = vand.u32 %v502, 65535
      %v519 = vshra.s32 %v502, 16
      %v520 = vcvt.s32.f32 %v518
      %v521 = vcvt.s32.f32 %v519
      %522 = vmin.xlane.f32.xlu0 %v521
      %v523 = vpop.xlane.xlu0 %522
      %vm524 = vcmp.eq.f32.partialorder %v521, %v523
      %v525 = vsel %vm524, %v520, inf
      %526 = vmin.xlane.f32.xlu0 %v525
      %v527 = vpop.xlane.xlu0 %526
      %v528 = vcvt.f32.s32 %v527
      %v529 = vcvt.f32.s32 %v523
      %v530 = vshll.u32 %v529, 16
      %v531 = vadd.s32 %v530, %v528
      %v532 = vand.u32 %v503, 65535
      %v533 = vshra.s32 %v503, 16
      %v534 = vcvt.s32.f32 %v532
      %v535 = vcvt.s32.f32 %v533
      %536 = vmin.xlane.f32.xlu0 %v535
      %v537 = vpop.xlane.xlu0 %536
      %vm538 = vcmp.eq.f32.partialorder %v535, %v537
      %v539 = vsel %vm538, %v534, inf
      %540 = vmin.xlane.f32.xlu0 %v539
      %v541 = vpop.xlane.xlu0 %540
      %v542 = vcvt.f32.s32 %v541
      %v543 = vcvt.f32.s32 %v537
      %v544 = vshll.u32 %v543, 16
      %v545 = vadd.s32 %v544, %v542
      %v546 = vand.u32 %v504, 65535
      %v547 = vshra.s32 %v504, 16
      %v548 = vcvt.s32.f32 %v546
      %v549 = vcvt.s32.f32 %v547
      %550 = vmin.xlane.f32.xlu0 %v549
      %v551 = vpop.xlane.xlu0 %550
      %vm552 = vcmp.eq.f32.partialorder %v549, %v551
      %v553 = vsel %vm552, %v548, inf
      %554 = vmin.xlane.f32.xlu0 %v553
      %v555 = vpop.xlane.xlu0 %554
      %v556 = vcvt.f32.s32 %v555
      %v557 = vcvt.f32.s32 %v551
      %v558 = vshll.u32 %v557, 16
      %v559 = vadd.s32 %v558, %v556
      %v560 = vand.u32 %v505, 65535
      %v561 = vshra.s32 %v505, 16
      %v562 = vcvt.s32.f32 %v560
      %v563 = vcvt.s32.f32 %v561
      %564 = vmin.xlane.f32.xlu0 %v563
      %v565 = vpop.xlane.xlu0 %564
      %vm566 = vcmp.eq.f32.partialorder %v563, %v565
      %v567 = vsel %vm566, %v562, inf
      %568 = vmin.xlane.f32.xlu0 %v567
      %v569 = vpop.xlane.xlu0 %568
      %v570 = vcvt.f32.s32 %v569
      %v571 = vcvt.f32.s32 %v565
      %v572 = vshll.u32 %v571, 16
      %v573 = vadd.s32 %v572, %v570
      %v574 = vand.u32 %v506, 65535
      %v575 = vshra.s32 %v506, 16
      %v576 = vcvt.s32.f32 %v574
      %v577 = vcvt.s32.f32 %v575
      %578 = vmin.xlane.f32.xlu0 %v577
      %v579 = vpop.xlane.xlu0 %578
      %vm580 = vcmp.eq.f32.partialorder %v577, %v579
      %v581 = vsel %vm580, %v576, inf
      %582 = vmin.xlane.f32.xlu0 %v581
      %v583 = vpop.xlane.xlu0 %582
      %v584 = vcvt.f32.s32 %v583
      %v585 = vcvt.f32.s32 %v579
      %v586 = vshll.u32 %v585, 16
      %v587 = vadd.s32 %v586, %v584
      %v588 = vand.u32 %v507, 65535
      %v589 = vshra.s32 %v507, 16
      %v590 = vcvt.s32.f32 %v588
      %v591 = vcvt.s32.f32 %v589
      %592 = vmin.xlane.f32.xlu0 %v591
      %v593 = vpop.xlane.xlu0 %592
      %vm594 = vcmp.eq.f32.partialorder %v591, %v593
      %v595 = vsel %vm594, %v590, inf
      %596 = vmin.xlane.f32.xlu0 %v595
      %v597 = vpop.xlane.xlu0 %596
      %v598 = vcvt.f32.s32 %v597
      %v599 = vcvt.f32.s32 %v593
      %v600 = vshll.u32 %v599, 16
      %v601 = vadd.s32 %v600, %v598
      %v602 = vand.u32 %v508, 65535
      %v603 = vshra.s32 %v508, 16
      %v604 = vcvt.s32.f32 %v602
      %v605 = vcvt.s32.f32 %v603
      %606 = vmin.xlane.f32.xlu0 %v605
      %v607 = vpop.xlane.xlu0 %606
      %vm608 = vcmp.eq.f32.partialorder %v605, %v607
      %v609 = vsel %vm608, %v604, inf
      %610 = vmin.xlane.f32.xlu0 %v609
      %v611 = vpop.xlane.xlu0 %610
      %v612 = vcvt.f32.s32 %v611
      %v613 = vcvt.f32.s32 %v607
      %v614 = vshll.u32 %v613, 16
      %v615 = vadd.s32 %v614, %v612
      %v616 = vand.u32 %v509, 65535
      %v617 = vshra.s32 %v509, 16
      %v618 = vcvt.s32.f32 %v616
      %v619 = vcvt.s32.f32 %v617
      %620 = vmin.xlane.f32.xlu0 %v619
      %v621 = vpop.xlane.xlu0 %620
      %vm622 = vcmp.eq.f32.partialorder %v619, %v621
      %v623 = vsel %vm622, %v618, inf
      %624 = vmin.xlane.f32.xlu0 %v623
      %v625 = vpop.xlane.xlu0 %624
      %v626 = vcvt.f32.s32 %v625
      %v627 = vcvt.f32.s32 %v621
      %v628 = vshll.u32 %v627, 16
      %v629 = vadd.s32 %v628, %v626
      %v630 = vand.u32 %v510, 65535
      %v631 = vshra.s32 %v510, 16
      %v632 = vcvt.s32.f32 %v630
      %v633 = vcvt.s32.f32 %v631
      %634 = vmin.xlane.f32.xlu0 %v633
      %v635 = vpop.xlane.xlu0 %634
      %vm636 = vcmp.eq.f32.partialorder %v633, %v635
      %v637 = vsel %vm636, %v632, inf
      %638 = vmin.xlane.f32.xlu0 %v637
      %v639 = vpop.xlane.xlu0 %638
      %v640 = vcvt.f32.s32 %v639
      %v641 = vcvt.f32.s32 %v635
      %v642 = vshll.u32 %v641, 16
      %v643 = vadd.s32 %v642, %v640
      %v644 = vand.u32 %v511, 65535
      %v645 = vshra.s32 %v511, 16
      %v646 = vcvt.s32.f32 %v644
      %v647 = vcvt.s32.f32 %v645
      %648 = vmin.xlane.f32.xlu0 %v647
      %v649 = vpop.xlane.xlu0 %648
      %vm650 = vcmp.eq.f32.partialorder %v647, %v649
      %v651 = vsel %vm650, %v646, inf
      %652 = vmin.xlane.f32.xlu0 %v651
      %v653 = vpop.xlane.xlu0 %652
      %v654 = vcvt.f32.s32 %v653
      %v655 = vcvt.f32.s32 %v649
      %v656 = vshll.u32 %v655, 16
      %v657 = vadd.s32 %v656, %v654
      %v658 = vand.u32 %v512, 65535
      %v659 = vshra.s32 %v512, 16
      %v660 = vcvt.s32.f32 %v658
      %v661 = vcvt.s32.f32 %v659
      %662 = vmin.xlane.f32.xlu0 %v661
      %v663 = vpop.xlane.xlu0 %662
      %vm664 = vcmp.eq.f32.partialorder %v661, %v663
      %v665 = vsel %vm664, %v660, inf
      %666 = vmin.xlane.f32.xlu0 %v665
      %v667 = vpop.xlane.xlu0 %666
      %v668 = vcvt.f32.s32 %v667
      %v669 = vcvt.f32.s32 %v663
      %v670 = vshll.u32 %v669, 16
      %v671 = vadd.s32 %v670, %v668
      %v672 = vand.u32 %v513, 65535
      %v673 = vshra.s32 %v513, 16
      %v674 = vcvt.s32.f32 %v672
      %v675 = vcvt.s32.f32 %v673
      %676 = vmin.xlane.f32.xlu0 %v675
      %v677 = vpop.xlane.xlu0 %676
      %vm678 = vcmp.eq.f32.partialorder %v675, %v677
      %v679 = vsel %vm678, %v674, inf
      %680 = vmin.xlane.f32.xlu0 %v679
      %v681 = vpop.xlane.xlu0 %680
      %v682 = vcvt.f32.s32 %v681
      %v683 = vcvt.f32.s32 %v677
      %v684 = vshll.u32 %v683, 16
      %v685 = vadd.s32 %v684, %v682
      %v686 = vand.u32 %v514, 65535
      %v687 = vshra.s32 %v514, 16
      %v688 = vcvt.s32.f32 %v686
      %v689 = vcvt.s32.f32 %v687
      %690 = vmin.xlane.f32.xlu0 %v689
      %v691 = vpop.xlane.xlu0 %690
      %vm692 = vcmp.eq.f32.partialorder %v689, %v691
      %v693 = vsel %vm692, %v688, inf
      %694 = vmin.xlane.f32.xlu0 %v693
      %v695 = vpop.xlane.xlu0 %694
      %v696 = vcvt.f32.s32 %v695
      %v697 = vcvt.f32.s32 %v691
      %v698 = vshll.u32 %v697, 16
      %v699 = vadd.s32 %v698, %v696
      %v700 = vand.u32 %v515, 65535
      %v701 = vshra.s32 %v515, 16
      %v702 = vcvt.s32.f32 %v700
      %v703 = vcvt.s32.f32 %v701
      %704 = vmin.xlane.f32.xlu0 %v703
      %v705 = vpop.xlane.xlu0 %704
      %vm706 = vcmp.eq.f32.partialorder %v703, %v705
      %v707 = vsel %vm706, %v702, inf
      %708 = vmin.xlane.f32.xlu0 %v707
      %v709 = vpop.xlane.xlu0 %708
      %v710 = vcvt.f32.s32 %v709
      %v711 = vcvt.f32.s32 %v705
      %v712 = vshll.u32 %v711, 16
      %v713 = vadd.s32 %v712, %v710
      %v714 = vand.u32 %v516, 65535
      %v715 = vshra.s32 %v516, 16
      %v716 = vcvt.s32.f32 %v714
      %v717 = vcvt.s32.f32 %v715
      %718 = vmin.xlane.f32.xlu0 %v717
      %v719 = vpop.xlane.xlu0 %718
      %vm720 = vcmp.eq.f32.partialorder %v717, %v719
      %v721 = vsel %vm720, %v716, inf
      %722 = vmin.xlane.f32.xlu0 %v721
      %v723 = vpop.xlane.xlu0 %722
      %v724 = vcvt.f32.s32 %v723
      %v725 = vcvt.f32.s32 %v719
      %v726 = vshll.u32 %v725, 16
      %v727 = vadd.s32 %v726, %v724
      %v728 = vand.u32 %v517, 65535
      %v729 = vshra.s32 %v517, 16
      %v730 = vcvt.s32.f32 %v728
      %v731 = vcvt.s32.f32 %v729
      %732 = vmin.xlane.f32.xlu0 %v731
      %v733 = vpop.xlane.xlu0 %732
      %vm734 = vcmp.eq.f32.partialorder %v731, %v733
      %v735 = vsel %vm734, %v730, inf
      %736 = vmin.xlane.f32.xlu0 %v735
      %v737 = vpop.xlane.xlu0 %736
      %v738 = vcvt.f32.s32 %v737
      %v739 = vcvt.f32.s32 %v733
      %v740 = vshll.u32 %v739, 16
      %v741 = vadd.s32 %v740, %v738
      %742 = vst [vmem:[%s213] sm:$0xff] %v531
      %743 = vst [vmem:[%s213 + $0x8] sm:$0xff] %v545
      %744 = vst [vmem:[%s213 + $0x10] sm:$0xff] %v559
      %745 = vst [vmem:[%s213 + $0x18] sm:$0xff] %v573
      %746 = vst [vmem:[%s213 + $0x20] sm:$0xff] %v587
      %747 = vst [vmem:[%s213 + $0x28] sm:$0xff] %v601
      %748 = vst [vmem:[%s213 + $0x30] sm:$0xff] %v615
      %749 = vst [vmem:[%s213 + $0x38] sm:$0xff] %v629
      %750 = vst [vmem:[%s213 + $0x40] sm:$0xff] %v643
      %751 = vst [vmem:[%s213 + $0x48] sm:$0xff] %v657
      %752 = vst [vmem:[%s213 + $0x50] sm:$0xff] %v671
      %753 = vst [vmem:[%s213 + $0x58] sm:$0xff] %v685
      %754 = vst [vmem:[%s213 + $0x60] sm:$0xff] %v699
      %755 = vst [vmem:[%s213 + $0x68] sm:$0xff] %v713
      %756 = vst [vmem:[%s213 + $0x70] sm:$0xff] %v727
      %757 = vst [vmem:[%s213 + $0x78] sm:$0xff] %v741
      %s758 = smul.u32 16, %s16
      %p759 = scmp.lt.s32.totalorder %s758, 31
      %s760 = scalar_select %p759, %s758, 31
      %s761 = smul.addr %s760, 8
      %s762 = scalar_lea.vmem %s3, %s761
      %s763 = smul.u32 16, %s16
      %p764 = scmp.lt.s32.totalorder %s763, 31
      %s765 = scalar_select %p764, %s763, 31
      %s766 = smul.addr %s765, 8
      %s767 = scalar_lea.vmem %s4, %s766
      // Predicated region
      $region33: #{policy_act.1} parent=31 // pred_check
        %p768 = pneg %p102
      $region34: #{policy_act.1} parent=31 // pred_check_branch
        %770 = sbr.rel (%p768) target = $region36
      $region35: #{policy_act.1} parent=31 // pred_region
        %s771 = smul.u32 16, %s16
      $region36: #{policy_act.1} parent=31 // pred_fallthru
        _
      // Predicated region
      $region37: #{policy_act.1} parent=31 // pred_check
        %p772 = pneg %p128
      $region38: #{policy_act.1} parent=31 // pred_check_branch
        %774 = sbr.rel (%p772) target = $region40
      $region39: #{policy_act.1} parent=31 // pred_region
        %s775 = smul.u32 16, %s16
      $region40: #{policy_act.1} parent=31 // pred_fallthru
        _
    $region32: #{policy_act.1} parent=5 // pred_fallthru
      _
    %p776 = scmp.le.s32.totalorder 2, %s11
    // Predicated region
    $region41: #{policy_act.1} parent=5 // pred_check
      %p777 = pneg %p776
    $region42: #{policy_act.1} parent=5 // pred_check_branch
      %779 = sbr.rel (%p777) target = $region44
    $region43: #{policy_act.1} parent=5 // pred_region
      %s780 = ssub.s32 %s11, 2
      // Predicated region
      $region45: #{policy_act.1} parent=43 // pred_check
        %p781 = pneg %p108
      $region46: #{policy_act.1} parent=43 // pred_check_branch
        %783 = sbr.rel (%p781) target = $region48
      $region47: #{policy_act.1} parent=43 // pred_region
        %s784 = smul.u32 16, %s17
        %p785 = scmp.lt.s32.totalorder %s784, 31
        %s786 = scalar_select %p785, %s784, 31
        %s787 = smul.addr %s786, 8
        %s788 = scalar_lea.vmem %s3, %s787
      $region48: #{policy_act.1} parent=43 // pred_fallthru
        _
      // Predicated region
      $region49: #{policy_act.1} parent=43 // pred_check
        %p789 = pneg %p134
      $region50: #{policy_act.1} parent=43 // pred_check_branch
        %791 = sbr.rel (%p789) target = $region52
      $region51: #{policy_act.1} parent=43 // pred_region
        %s792 = smul.u32 16, %s17
        %p793 = scmp.lt.s32.totalorder %s792, 31
        %s794 = scalar_select %p793, %s792, 31
        %s795 = smul.addr %s794, 8
        %s796 = scalar_lea.vmem %s4, %s795
      $region52: #{policy_act.1} parent=43 // pred_fallthru
        _
    $region44: #{policy_act.1} parent=5 // pred_fallthru
      _
  $region6: #{policy_act.1} parent=0 // loop_footer
    %s15 = sadd.s32 1, %s11
  $region7: #{policy_act.1} parent=0 // loop_footer_branch
    %10 = sbr.rel target = $region3
  $region8: #{policy_act.1} parent=0 // loop_exit
    _

</llo_original>
